<compile_context>
chip_gen: v7x
topology: tpu7x:2x2x1
jax: 0.10.0
libtpu: 0.0.40
codegen_flags: <defaults>
</compile_context>

<pallas_src>
import numpy as np

import jax
import jax.numpy as jnp
from jax import lax
from jax.experimental import pallas as pl
from jax.experimental.pallas import tpu as pltpu

# ---- problem sizes (small, consistent with the module) ----------------------
B = 2          # batch
L = 8          # sequence length
D = 32         # input_dim
N_HEADS = 4    # n_head
DK = 8         # dim_k
DV = 8         # dim_v  (== DK; head mask / fused-QKV layout assumes this)
HID = 64       # dim_hidden
TEMP = DK ** 0.5

BL = B * L                  # 16 rows: (batch, length) folded
BHL = B * N_HEADS * L       # 64 rows: (batch, head, length) stacked
HDK = N_HEADS * DK          # 32
HDV = N_HEADS * DV          # 32
QKV_W = 3 * HDK             # 96 (fused q|k|v output width)

# ---- packed-slab layout (rows; all offsets multiples of 8, 128 lanes wide) --
LANES = 128
R_WQKV, R_BQKV = 0, 32          # (32, 96), (1, 96)
R_WFC,  R_BFC  = 40, 72         # (32, 32), (1, 32)
R_W1,   R_B1   = 80, 112        # (32, 64), (1, 64)
R_W2,   R_B2   = 120, 184       # (64, 32), (1, 32)
R_REP          = 192            # (64, 16) head-replication selector
R_REPT         = 256            # (16, 64) head-compaction selector
R_QMUL         = 272            # (64, 96) 1/temp on q cols, head mask on k/v cols
R_BADD         = 336            # (64, 64) additive block mask (0 / -1e30)
R_BMUL         = 400            # (64, 64) multiplicative block mask (1 / 0)
R_CSEL         = 464            # (64, 8)  attention-map compaction selector
R_TOTAL        = 528            # ~264 KB f32: trivially fits VMEM on all gens


def _constant_slab():
    """Host-side (numpy) precomputation of all constant selector/mask matrices."""
    slab = np.zeros((R_TOTAL, LANES), np.float32)
    rows = np.arange(BHL)

    # rep replicates each (b, l) row once per head -> stacked (b, h, l) order.
    bl_of_row = (rows // (N_HEADS * L)) * L + (rows % L)
    rep = (bl_of_row[:, None] == np.arange(BL)[None, :]).astype(np.float32)
    slab[R_REP:R_REP + BHL, :BL] = rep
    # rep^T sums the per-head rows back into (b, l) rows (heads use disjoint cols).
    slab[R_REPT:R_REPT + BL, :BHL] = rep.T

    # Fused-QKV per-column multiplier: q cols get 1/temp, k/v cols get head mask.
    head_of_row = (rows // L) % N_HEADS
    head_of_col = np.arange(HDK) // DK
    head_mask = (head_of_row[:, None] == head_of_col[None, :]).astype(np.float32)
    slab[R_QMUL:R_QMUL + BHL, :QKV_W] = np.concatenate(
        [np.full((BHL, HDK), 1.0 / TEMP, np.float32), head_mask, head_mask], axis=1)

    # Block-diagonal (batch, head) score masks: additive + exact 0/1 guard.
    blk = (rows[:, None] // L) == (rows[None, :] // L)
    slab[R_BADD:R_BADD + BHL, :BHL] = np.where(blk, 0.0, -1e30).astype(np.float32)
    slab[R_BMUL:R_BMUL + BHL, :BHL] = blk.astype(np.float32)

    # csel compacts the block-diagonal softmax into a (BHL, L) slab.
    slab[R_CSEL:R_CSEL + BHL, :L] = (
        (rows[:, None] % L) == np.arange(L)[None, :]).astype(np.float32)
    return slab


_CONST_SLAB = _constant_slab()


def pack_inputs(params):
    """Pack all weights/biases (QKV fused) into the constant slab. Done once."""
    (wq, bq, wk, bk, wv, bv, wfc, bfc, w1, b1, w2, b2) = params
    slab = jnp.asarray(_CONST_SLAB)
    slab = slab.at[R_WQKV:R_WQKV + D, :QKV_W].set(jnp.concatenate([wq, wk, wv], 1))
    slab = slab.at[R_BQKV:R_BQKV + 1, :QKV_W].set(jnp.concatenate([bq, bk, bv], 1))
    slab = slab.at[R_WFC:R_WFC + HDV, :D].set(wfc)
    slab = slab.at[R_BFC:R_BFC + 1, :D].set(bfc)
    slab = slab.at[R_W1:R_W1 + D, :HID].set(w1)
    slab = slab.at[R_B1:R_B1 + 1, :HID].set(b1)
    slab = slab.at[R_W2:R_W2 + HID, :D].set(w2)
    slab = slab.at[R_B2:R_B2 + 1, :D].set(b2)
    return slab


def encoder_kernel(x_ref, p_ref, out_ref, att_ref):
    """Single invocation: whole problem in VMEM.

    x_ref   : (B*L, D)
    p_ref   : (R_TOTAL, 128) packed params + constants (one DMA)
    out_ref : (B*L, D)
    att_ref : (B*H*L, L)   (wrapper reshapes to (B, H, L, L))
    """
    f32 = jnp.float32
    x = x_ref[...]                                                    # (BL, D)

    # --- carve params / constants out of the packed slab (static views) ------
    wqkv  = p_ref[R_WQKV:R_WQKV + D,   :QKV_W]                        # (32, 96)
    bqkv  = p_ref[R_BQKV:R_BQKV + 1,   :QKV_W]                        # (1, 96)
    wfc   = p_ref[R_WFC:R_WFC + HDV,   :D]                            # (32, 32)
    bfc   = p_ref[R_BFC:R_BFC + 1,     :D]                            # (1, 32)
    w1    = p_ref[R_W1:R_W1 + D,       :HID]                          # (32, 64)
    b1    = p_ref[R_B1:R_B1 + 1,       :HID]                          # (1, 64)
    w2    = p_ref[R_W2:R_W2 + HID,     :D]                            # (64, 32)
    b2    = p_ref[R_B2:R_B2 + 1,       :D]                            # (1, 32)
    rep   = p_ref[R_REP:R_REP + BHL,   :BL]                           # (64, 16)
    rep_t = p_ref[R_REPT:R_REPT + BL,  :BHL]                          # (16, 64)
    qmul  = p_ref[R_QMUL:R_QMUL + BHL, :QKV_W]                        # (64, 96)
    badd  = p_ref[R_BADD:R_BADD + BHL, :BHL]                          # (64, 64)
    bmul  = p_ref[R_BMUL:R_BMUL + BHL, :BHL]                          # (64, 64)
    csel  = p_ref[R_CSEL:R_CSEL + BHL, :L]                            # (64, 8)

    # --- replicate rows per head, then ONE fused QKV projection matmul -------
    x_rep = jnp.dot(rep, x, preferred_element_type=f32)               # (BHL, D)
    qkv = (jnp.dot(x_rep, wqkv, preferred_element_type=f32) + bqkv) * qmul
    q = qkv[:, :HDK]                 # scaled by 1/temp via qmul
    k = qkv[:, HDK:2 * HDK]          # head-masked via qmul
    v = qkv[:, 2 * HDK:]             # head-masked via qmul

    # --- all heads & batches in ONE score matmul (no kh.T materialisation) ---
    scores = lax.dot_general(q, k, (((1,), (1,)), ((), ())),
                             preferred_element_type=f32) + badd       # (BHL, BHL)
    scores = scores - jnp.max(scores, axis=-1, keepdims=True)
    p = jnp.exp(scores) * bmul        # exact 0 off-block (robust guard)
    denom = jnp.sum(p, axis=-1, keepdims=True)
    inv = pl.reciprocal(denom, approx=True)       # EUP slot (otherwise idle)
    inv = inv * (2.0 - denom * inv)               # one Newton step -> f32 accurate
    p = p * inv                                                        # (BHL, BHL)

    # --- critical chain first (MRF pop order matters on v5e/v6e) -------------
    ctx_s = jnp.dot(p, v, preferred_element_type=f32)                 # (BHL, H*DV)
    ctx = jnp.dot(rep_t, ctx_s, preferred_element_type=f32)           # (BL, H*DV)
    attn_out = jnp.dot(ctx, wfc, preferred_element_type=f32) + bfc + x
    h1 = jnp.maximum(jnp.dot(attn_out, w1, preferred_element_type=f32) + b1, 0.0)
    out_ref[...] = (jnp.dot(h1, w2, preferred_element_type=f32) + b2) + attn_out

    # --- attention maps LAST: off the critical path, drains after out chain --
    att_ref[...] = jnp.dot(p, csel, preferred_element_type=f32)       # (BHL, L)


def encoder_layer(x, slab):
    """x: (B, L, D) f32, slab: packed params. Returns (out (B,L,D), att (B,H,L,L))."""
    x2 = x.reshape(BL, D)          # fold batch into rows (free layout plumbing)
    vmem = pl.BlockSpec(memory_space=pltpu.MemorySpace.VMEM)   # full array, no pipeline

    out, att = pl.pallas_call(
        encoder_kernel,
        in_specs=[vmem, vmem],
        out_specs=(vmem, vmem),
        out_shape=(jax.ShapeDtypeStruct((BL, D), jnp.float32),
                   jax.ShapeDtypeStruct((BHL, L), jnp.float32)),
    )(x2, slab)

    return out.reshape(B, L, D), att.reshape(B, N_HEADS, L, L)


def encoder_layer_ref(x, params):
    """Pure-JAX reference of the same math for a correctness check."""
    (wq, bq, wk, bk, wv, bv, wfc, bfc, w1, b1, w2, b2) = params
    q = x @ wq + bq
    k = x @ wk + bk
    v = x @ wv + bv
    q = q.reshape(B, L, N_HEADS, DK).transpose(0, 2, 1, 3)
    k = k.reshape(B, L, N_HEADS, DK).transpose(0, 2, 1, 3)
    v = v.reshape(B, L, N_HEADS, DV).transpose(0, 2, 1, 3)
    att = jnp.einsum("bhqd,bhkd->bhqk", q / TEMP, k)
    att = jax.nn.softmax(att, axis=-1)
    ctx = jnp.einsum("bhqk,bhkd->bhqd", att, v)
    ctx = ctx.transpose(0, 2, 1, 3).reshape(B, L, N_HEADS * DV)
    attn_out = ctx @ wfc + bfc + x
    h1 = jax.nn.relu(attn_out @ w1 + b1)
    y = h1 @ w2 + b2 + attn_out
    return y, att


def make_params(key):
    """Deterministic synthetic parameters (Linear weights stored as (in,out))."""
    ks = jax.random.split(key, 12)

    def lin(kw, kb, fan_in, fan_out):
        bound = 1.0 / (fan_in ** 0.5)
        w = jax.random.uniform(kw, (fan_in, fan_out), jnp.float32, -bound, bound)
        b = jax.random.uniform(kb, (1, fan_out), jnp.float32, -bound, bound)
        return w, b

    wq, bq = lin(ks[0], ks[1], D, N_HEADS * DK)
    wk, bk = lin(ks[2], ks[3], D, N_HEADS * DK)
    wv, bv = lin(ks[4], ks[5], D, N_HEADS * DV)
    wfc, bfc = lin(ks[6], ks[7], N_HEADS * DV, D)
    w1, b1 = lin(ks[8], ks[9], D, HID)
    w2, b2 = lin(ks[10], ks[11], HID, D)
    return (wq, bq, wk, bk, wv, bv, wfc, bfc, w1, b1, w2, b2)


if __name__ == "__main__":
    key = jax.random.PRNGKey(0)
    kx, kp = jax.random.split(key)
    x = jax.random.normal(kx, (B, L, D), jnp.float32)
    params = make_params(kp)
    slab = jax.block_until_ready(pack_inputs(params))   # one-time packing

    out, att = jax.block_until_ready(encoder_layer(x, slab))

    out_exp, att_exp = encoder_layer_ref(x, params)
    assert out.shape == (B, L, D) and att.shape == (B, N_HEADS, L, L)
    assert jnp.allclose(out, out_exp, atol=2e-4, rtol=2e-4)
    assert jnp.allclose(att, att_exp, atol=2e-4, rtol=2e-4)

    print("KERNEL_OK")
</pallas_src>

<mosaic_0001>
module attributes {stable_mosaic.version = 11 : i64} {
  func.func @encoder_kernel(%arg0: memref<16x32xf32, #tpu.memory_space<vmem>>, %arg1: memref<528x128xf32, #tpu.memory_space<vmem>>, %arg2: memref<16x32xf32, #tpu.memory_space<vmem>>, %arg3: memref<64x8xf32, #tpu.memory_space<vmem>>) attributes {dimension_semantics = [], scalar_prefetch = 0 : i64, scratch_operands = 0 : i64, tpu.core_type = #tpu.core_type<tc>} {
    %c0 = arith.constant 0 : index
    %c0_0 = arith.constant 0 : index
    %0 = vector.load %arg0[%c0, %c0_0] : memref<16x32xf32, #tpu.memory_space<vmem>>, vector<16x32xf32>
    %c0_1 = arith.constant 0 : index
    %c0_2 = arith.constant 0 : index
    %1 = vector.load %arg1[%c0_1, %c0_2] : memref<528x128xf32, #tpu.memory_space<vmem>>, vector<32x96xf32>
    %c32 = arith.constant 32 : index
    %c0_3 = arith.constant 0 : index
    %2 = vector.load %arg1[%c32, %c0_3] : memref<528x128xf32, #tpu.memory_space<vmem>>, vector<1x96xf32>
    %c40 = arith.constant 40 : index
    %c0_4 = arith.constant 0 : index
    %3 = vector.load %arg1[%c40, %c0_4] : memref<528x128xf32, #tpu.memory_space<vmem>>, vector<32x32xf32>
    %c72 = arith.constant 72 : index
    %c0_5 = arith.constant 0 : index
    %4 = vector.load %arg1[%c72, %c0_5] : memref<528x128xf32, #tpu.memory_space<vmem>>, vector<1x32xf32>
    %c80 = arith.constant 80 : index
    %c0_6 = arith.constant 0 : index
    %5 = vector.load %arg1[%c80, %c0_6] : memref<528x128xf32, #tpu.memory_space<vmem>>, vector<32x64xf32>
    %c112 = arith.constant 112 : index
    %c0_7 = arith.constant 0 : index
    %6 = vector.load %arg1[%c112, %c0_7] : memref<528x128xf32, #tpu.memory_space<vmem>>, vector<1x64xf32>
    %c120 = arith.constant 120 : index
    %c0_8 = arith.constant 0 : index
    %7 = vector.load %arg1[%c120, %c0_8] : memref<528x128xf32, #tpu.memory_space<vmem>>, vector<64x32xf32>
    %c184 = arith.constant 184 : index
    %c0_9 = arith.constant 0 : index
    %8 = vector.load %arg1[%c184, %c0_9] : memref<528x128xf32, #tpu.memory_space<vmem>>, vector<1x32xf32>
    %c192 = arith.constant 192 : index
    %c0_10 = arith.constant 0 : index
    %9 = vector.load %arg1[%c192, %c0_10] : memref<528x128xf32, #tpu.memory_space<vmem>>, vector<64x16xf32>
    %c256 = arith.constant 256 : index
    %c0_11 = arith.constant 0 : index
    %10 = vector.load %arg1[%c256, %c0_11] : memref<528x128xf32, #tpu.memory_space<vmem>>, vector<16x64xf32>
    %c272 = arith.constant 272 : index
    %c0_12 = arith.constant 0 : index
    %11 = vector.load %arg1[%c272, %c0_12] : memref<528x128xf32, #tpu.memory_space<vmem>>, vector<64x96xf32>
    %c336 = arith.constant 336 : index
    %c0_13 = arith.constant 0 : index
    %12 = vector.load %arg1[%c336, %c0_13] : memref<528x128xf32, #tpu.memory_space<vmem>>, vector<64x64xf32>
    %c400 = arith.constant 400 : index
    %c0_14 = arith.constant 0 : index
    %13 = vector.load %arg1[%c400, %c0_14] : memref<528x128xf32, #tpu.memory_space<vmem>>, vector<64x64xf32>
    %c464 = arith.constant 464 : index
    %c0_15 = arith.constant 0 : index
    %14 = vector.load %arg1[%c464, %c0_15] : memref<528x128xf32, #tpu.memory_space<vmem>>, vector<64x8xf32>
    %cst = arith.constant dense<0.000000e+00> : vector<64x32xf32>
    %15 = tpu.matmul %9, %0, %cst {dimension_numbers = #tpu.dot_dimension_numbers<[1], [0], [0], [1], [0, 0, 1, 1], [], []>} : vector<64x16xf32>, vector<16x32xf32>, vector<64x32xf32> -> vector<64x32xf32>
    %cst_16 = arith.constant dense<0.000000e+00> : vector<64x96xf32>
    %16 = tpu.matmul %15, %1, %cst_16 {dimension_numbers = #tpu.dot_dimension_numbers<[1], [0], [0], [1], [0, 0, 1, 1], [], []>} : vector<64x32xf32>, vector<32x96xf32>, vector<64x96xf32> -> vector<64x96xf32>
    %17 = vector.broadcast %2 : vector<1x96xf32> to vector<64x96xf32>
    %18 = arith.addf %16, %17 : vector<64x96xf32>
    %19 = arith.mulf %18, %11 : vector<64x96xf32>
    %20 = vector.extract_strided_slice %19 {offsets = [0, 0], sizes = [64, 32], strides = [1, 1]} : vector<64x96xf32> to vector<64x32xf32>
    %21 = vector.extract_strided_slice %19 {offsets = [0, 32], sizes = [64, 32], strides = [1, 1]} : vector<64x96xf32> to vector<64x32xf32>
    %22 = vector.extract_strided_slice %19 {offsets = [0, 64], sizes = [64, 32], strides = [1, 1]} : vector<64x96xf32> to vector<64x32xf32>
    %cst_17 = arith.constant dense<0.000000e+00> : vector<64x64xf32>
    %23 = tpu.matmul %20, %21, %cst_17 {dimension_numbers = #tpu.dot_dimension_numbers<[1], [1], [0], [0], [0, 0, 1, 0], [], []>} : vector<64x32xf32>, vector<64x32xf32>, vector<64x64xf32> -> vector<64x64xf32>
    %24 = arith.addf %23, %12 : vector<64x64xf32>
    %cst_18 = arith.constant dense<0xFF800000> : vector<64xf32>
    %25 = vector.multi_reduction <maximumf>, %24, %cst_18 [1] : vector<64x64xf32> to vector<64xf32>
    %26 = vector.shape_cast %25 : vector<64xf32> to vector<64x1xf32>
    %27 = vector.broadcast %26 : vector<64x1xf32> to vector<64x64xf32>
    %28 = arith.subf %24, %27 : vector<64x64xf32>
    %29 = math.exp %28 : vector<64x64xf32>
    %30 = arith.mulf %29, %13 : vector<64x64xf32>
    %cst_19 = arith.constant dense<0.000000e+00> : vector<64xf32>
    %31 = vector.multi_reduction <add>, %30, %cst_19 [1] : vector<64x64xf32> to vector<64xf32>
    %32 = vector.shape_cast %31 : vector<64xf32> to vector<64x1xf32>
    %33 = tpu.reciprocal %32 {approx = true} : vector<64x1xf32> -> vector<64x1xf32>
    %34 = arith.mulf %32, %33 : vector<64x1xf32>
    %cst_20 = arith.constant 2.000000e+00 : f32
    %35 = vector.broadcast %cst_20 : f32 to vector<64x1xf32>
    %36 = arith.subf %35, %34 : vector<64x1xf32>
    %37 = arith.mulf %33, %36 : vector<64x1xf32>
    %38 = vector.broadcast %37 : vector<64x1xf32> to vector<64x64xf32>
    %39 = arith.mulf %30, %38 : vector<64x64xf32>
    %cst_21 = arith.constant dense<0.000000e+00> : vector<64x32xf32>
    %40 = tpu.matmul %39, %22, %cst_21 {dimension_numbers = #tpu.dot_dimension_numbers<[1], [0], [0], [1], [0, 0, 1, 1], [], []>} : vector<64x64xf32>, vector<64x32xf32>, vector<64x32xf32> -> vector<64x32xf32>
    %cst_22 = arith.constant dense<0.000000e+00> : vector<16x32xf32>
    %41 = tpu.matmul %10, %40, %cst_22 {dimension_numbers = #tpu.dot_dimension_numbers<[1], [0], [0], [1], [0, 0, 1, 1], [], []>} : vector<16x64xf32>, vector<64x32xf32>, vector<16x32xf32> -> vector<16x32xf32>
    %cst_23 = arith.constant dense<0.000000e+00> : vector<16x32xf32>
    %42 = tpu.matmul %41, %3, %cst_23 {dimension_numbers = #tpu.dot_dimension_numbers<[1], [0], [0], [1], [0, 0, 1, 1], [], []>} : vector<16x32xf32>, vector<32x32xf32>, vector<16x32xf32> -> vector<16x32xf32>
    %43 = vector.broadcast %4 : vector<1x32xf32> to vector<16x32xf32>
    %44 = arith.addf %42, %43 : vector<16x32xf32>
    %45 = arith.addf %44, %0 : vector<16x32xf32>
    %cst_24 = arith.constant dense<0.000000e+00> : vector<16x64xf32>
    %46 = tpu.matmul %45, %5, %cst_24 {dimension_numbers = #tpu.dot_dimension_numbers<[1], [0], [0], [1], [0, 0, 1, 1], [], []>} : vector<16x32xf32>, vector<32x64xf32>, vector<16x64xf32> -> vector<16x64xf32>
    %47 = vector.broadcast %6 : vector<1x64xf32> to vector<16x64xf32>
    %48 = arith.addf %46, %47 : vector<16x64xf32>
    %cst_25 = arith.constant 0.000000e+00 : f32
    %49 = vector.broadcast %cst_25 : f32 to vector<16x64xf32>
    %50 = arith.maximumf %48, %49 : vector<16x64xf32>
    %cst_26 = arith.constant dense<0.000000e+00> : vector<16x32xf32>
    %51 = tpu.matmul %50, %7, %cst_26 {dimension_numbers = #tpu.dot_dimension_numbers<[1], [0], [0], [1], [0, 0, 1, 1], [], []>} : vector<16x64xf32>, vector<64x32xf32>, vector<16x32xf32> -> vector<16x32xf32>
    %52 = vector.broadcast %8 : vector<1x32xf32> to vector<16x32xf32>
    %53 = arith.addf %51, %52 : vector<16x32xf32>
    %54 = arith.addf %53, %45 : vector<16x32xf32>
    %c0_27 = arith.constant 0 : index
    %c0_28 = arith.constant 0 : index
    %55 = vector.load %arg2[%c0_27, %c0_28] : memref<16x32xf32, #tpu.memory_space<vmem>>, vector<16x32xf32>
    tpu.vector_store %arg2[%c0_27, %c0_28], %54 {strides = array<i32>} : memref<16x32xf32, #tpu.memory_space<vmem>>, vector<16x32xf32>,
    %cst_29 = arith.constant dense<0.000000e+00> : vector<64x8xf32>
    %56 = tpu.matmul %39, %14, %cst_29 {dimension_numbers = #tpu.dot_dimension_numbers<[1], [0], [0], [1], [0, 0, 1, 1], [], []>} : vector<64x64xf32>, vector<64x8xf32>, vector<64x8xf32> -> vector<64x8xf32>
    %c0_30 = arith.constant 0 : index
    %c0_31 = arith.constant 0 : index
    %57 = vector.load %arg3[%c0_30, %c0_31] : memref<64x8xf32, #tpu.memory_space<vmem>>, vector<64x8xf32>
    tpu.vector_store %arg3[%c0_30, %c0_31], %56 {strides = array<i32>} : memref<64x8xf32, #tpu.memory_space<vmem>>, vector<64x8xf32>,
    return
  }
}

</mosaic_0001>

<llo_original>
// kernel: tpu_custom_call.1
$region0: #{tpu_custom_call.1}
  #allocation0 [shape = 'u32[]', space=smem, size = 0x4, offset = 0x4, fixed_abs, tag = 'smem constant byte address 0x4 - core index']
  #allocation1 [shape = 'u32[144,128]{1,0:T(1,128)}', space=vmem, size = 0x12000, scoped, tag = 'internal scratch']
  %s0 = inlined_call_operand.hbm [shape: f32[16,32], index: 0, kind: input, shape index: {}]
  %s1 = inlined_call_operand.hbm [shape: f32[528,128], index: 1, kind: input, shape index: {}]
  %s2 = inlined_call_operand.hbm [shape: f32[16,32], index: 2, kind: output, shape index: {0}]
  %s3 = inlined_call_operand.vmem [shape: f32[64,8], index: 3, kind: output, shape index: {1}]
  %4 = xla_tuple %s2, %s3
  %s5 = sld [smem:[#allocation0]]
  $region34: #{tpu_custom_call.1} parent=0
    _
  %s7 = ssub.s32 1, %s5
  %s8 = scalar_select 0, %s7, %s5
  $region1: #{tpu_custom_call.1} parent=0
    #allocation2 [shape = 'u8[8192]{0}', space=vmem, size = 0x2000, scoped, tag = 'input window, operand 0, single buffered']
    #allocation3 [shape = 's32[1]{0}', space=sflag, size = 0x4, scoped, tag = 'scoped memory for tpu_custom_call.1']
    #allocation4 [shape = 's32[1]{0}', space=sflag, size = 0x4, scoped, tag = 'scoped memory for tpu_custom_call.1']
    #allocation5 [shape = 'u8[270336]{0}', space=vmem, size = 0x42000, scoped, tag = 'input window, operand 1, single buffered']
    #allocation6 [shape = 's32[1]{0}', space=sflag, size = 0x4, scoped, tag = 'scoped memory for tpu_custom_call.1']
    #allocation7 [shape = 'u8[8192]{0}', space=vmem, size = 0x2000, scoped, tag = 'output window, operand 0, single buffered']
    %9 = vsyncpa [#allocation3], 0
    %10 = vsyncpa [#allocation6], 0
    %11 = vsyncpa [#allocation4], 0
    // Predicated region
    $region2: #{tpu_custom_call.1} parent=1 // pred_check
      _
    $region3: #{tpu_custom_call.1} parent=1 // pred_check_branch
      %13 = sbr.rel (0) target = $region5
    $region4: #{tpu_custom_call.1} parent=1 // pred_region
      %s15 = ssub.s32 256, 256
      %16 = vsyncadd [#allocation3], %s15
      %s17 = sshll.u32 [#allocation2], 4
      %s18 = int_to_ptr.vmem [resolvable:$true] %s17
      %23 = dma.hbm_to_vmem [thread:$0]  %s0, 256, %s18, [#allocation3], 128, 128, 8
    $region5: #{tpu_custom_call.1} parent=1 // pred_fallthru
      _
    // Predicated region
    $region6: #{tpu_custom_call.1} parent=1 // pred_check
      _
    $region7: #{tpu_custom_call.1} parent=1 // pred_check_branch
      %25 = sbr.rel (0) target = $region9
    $region8: #{tpu_custom_call.1} parent=1 // pred_region
      %s27 = ssub.s32 8448, 8448
      %28 = vsyncadd [#allocation6], %s27
      %s29 = sshll.u32 [#allocation5], 4
      %s30 = int_to_ptr.vmem [resolvable:$true] %s29
      %35 = dma.hbm_to_vmem [thread:$0]  %s1, 8448, %s30, [#allocation6], 128, 128, 8
    $region9: #{tpu_custom_call.1} parent=1 // pred_fallthru
      _
    // Predicated region
    $region10: #{tpu_custom_call.1} parent=1 // pred_check
      _
    $region11: #{tpu_custom_call.1} parent=1 // pred_check_branch
      %37 = sbr.rel (0) target = $region13
    $region12: #{tpu_custom_call.1} parent=1 // pred_region
      %38 = dma.done [#allocation3], 256
    $region13: #{tpu_custom_call.1} parent=1 // pred_fallthru
      _
    // Predicated region
    $region14: #{tpu_custom_call.1} parent=1 // pred_check
      _
    $region15: #{tpu_custom_call.1} parent=1 // pred_check_branch
      %40 = sbr.rel (0) target = $region17
    $region16: #{tpu_custom_call.1} parent=1 // pred_region
      %41 = dma.done [#allocation6], 8448
    $region17: #{tpu_custom_call.1} parent=1 // pred_fallthru
      _
    %v42 = vld [vmem:[#allocation2] sm:$0xff]
    %v43 = vld [vmem:[#allocation2 + $0x8] sm:$0xff]
    %v44 = vld [vmem:[#allocation5] sm:$0xff]
    %v45 = vld [vmem:[#allocation5 + $0x8] sm:$0xff]
    %v46 = vld [vmem:[#allocation5 + $0x10] sm:$0xff]
    %v47 = vld [vmem:[#allocation5 + $0x18] sm:$0xff]
    %v48 = vld [vmem:[#allocation5 + $0x20] sm:$0x1]
    %v49 = vld [vmem:[#allocation5 + $0x28] sm:$0xff]
    %v50 = vld [vmem:[#allocation5 + $0x30] sm:$0xff]
    %v51 = vld [vmem:[#allocation5 + $0x38] sm:$0xff]
    %v52 = vld [vmem:[#allocation5 + $0x40] sm:$0xff]
    %v53 = vld [vmem:[#allocation5 + $0x48] sm:$0x1]
    %v54 = vld [vmem:[#allocation5 + $0x50] sm:$0xff]
    %v55 = vld [vmem:[#allocation5 + $0x58] sm:$0xff]
    %v56 = vld [vmem:[#allocation5 + $0x60] sm:$0xff]
    %v57 = vld [vmem:[#allocation5 + $0x68] sm:$0xff]
    %v58 = vld [vmem:[#allocation5 + $0x70] sm:$0x1]
    %v59 = vld [vmem:[#allocation5 + $0x78] sm:$0xff]
    %v60 = vld [vmem:[#allocation5 + $0x80] sm:$0xff]
    %v61 = vld [vmem:[#allocation5 + $0x88] sm:$0xff]
    %v62 = vld [vmem:[#allocation5 + $0x90] sm:$0xff]
    %v63 = vld [vmem:[#allocation5 + $0x98] sm:$0xff]
    %v64 = vld [vmem:[#allocation5 + $0xa0] sm:$0xff]
    %v65 = vld [vmem:[#allocation5 + $0xa8] sm:$0xff]
    %v66 = vld [vmem:[#allocation5 + $0xb0] sm:$0xff]
    %v67 = vld [vmem:[#allocation5 + $0xb8] sm:$0x1]
    %v68 = vld [vmem:[#allocation5 + $0xc0] sm:$0xff]
    %v69 = vld [vmem:[#allocation5 + $0xc8] sm:$0xff]
    %v70 = vld [vmem:[#allocation5 + $0xd0] sm:$0xff]
    %v71 = vld [vmem:[#allocation5 + $0xd8] sm:$0xff]
    %v72 = vld [vmem:[#allocation5 + $0xe0] sm:$0xff]
    %v73 = vld [vmem:[#allocation5 + $0xe8] sm:$0xff]
    %v74 = vld [vmem:[#allocation5 + $0xf0] sm:$0xff]
    %v75 = vld [vmem:[#allocation5 + $0xf8] sm:$0xff]
    %v76 = vld [vmem:[#allocation5 + $0x100] sm:$0xff]
    %v77 = vld [vmem:[#allocation5 + $0x108] sm:$0xff]
    %v78 = vld [vmem:[#allocation5 + $0x110] sm:$0xff]
    %v79 = vld [vmem:[#allocation5 + $0x118] sm:$0xff]
    %v80 = vld [vmem:[#allocation5 + $0x120] sm:$0xff]
    %v81 = vld [vmem:[#allocation5 + $0x128] sm:$0xff]
    %v82 = vld [vmem:[#allocation5 + $0x130] sm:$0xff]
    %v83 = vld [vmem:[#allocation5 + $0x138] sm:$0xff]
    %v84 = vld [vmem:[#allocation5 + $0x140] sm:$0xff]
    %v85 = vld [vmem:[#allocation5 + $0x148] sm:$0xff]
    %v86 = vld [vmem:[#allocation5 + $0x150] sm:$0xff]
    %v87 = vld [vmem:[#allocation5 + $0x158] sm:$0xff]
    %v88 = vld [vmem:[#allocation5 + $0x160] sm:$0xff]
    %v89 = vld [vmem:[#allocation5 + $0x168] sm:$0xff]
    %v90 = vld [vmem:[#allocation5 + $0x170] sm:$0xff]
    %v91 = vld [vmem:[#allocation5 + $0x178] sm:$0xff]
    %v92 = vld [vmem:[#allocation5 + $0x180] sm:$0xff]
    %v93 = vld [vmem:[#allocation5 + $0x188] sm:$0xff]
    %v94 = vld [vmem:[#allocation5 + $0x190] sm:$0xff]
    %v95 = vld [vmem:[#allocation5 + $0x198] sm:$0xff]
    %v96 = vld [vmem:[#allocation5 + $0x1a0] sm:$0xff]
    %v97 = vld [vmem:[#allocation5 + $0x1a8] sm:$0xff]
    %v98 = vld [vmem:[#allocation5 + $0x1b0] sm:$0xff]
    %v99 = vld [vmem:[#allocation5 + $0x1b8] sm:$0xff]
    %v100 = vld [vmem:[#allocation5 + $0x1c0] sm:$0xff]
    %v101 = vld [vmem:[#allocation5 + $0x1c8] sm:$0xff]
    %v102 = vld [vmem:[#allocation5 + $0x1d0] sm:$0xff]
    %v103 = vld [vmem:[#allocation5 + $0x1d8] sm:$0xff]
    %v104 = vld [vmem:[#allocation5 + $0x1e0] sm:$0xff]
    %v105 = vld [vmem:[#allocation5 + $0x1e8] sm:$0xff]
    %v106 = vld [vmem:[#allocation5 + $0x1f0] sm:$0xff]
    %v107 = vld [vmem:[#allocation5 + $0x1f8] sm:$0xff]
    %v108 = vld [vmem:[#allocation5 + $0x200] sm:$0xff]
    %v109 = vld [vmem:[#allocation5 + $0x208] sm:$0xff]
    %vm110 = vcmask 130048
    %v112 = vsel %vm110, %v68, 0
    %v115 = vsel %vm110, %v69, 0
    %v118 = vsel %vm110, %v70, 0
    %v121 = vsel %vm110, %v71, 0
    %v124 = vsel %vm110, %v72, 0
    %v127 = vsel %vm110, %v73, 0
    %v130 = vsel %vm110, %v74, 0
    %v133 = vsel %vm110, %v75, 0
    %135 = vmatprep.subr.mxu0 0.0
    %136 = vmatpush1.msra.mxu0 %v42
    %137 = vmatprep.subr.mxu0 0.0
    %138 = vmatpush1.msra.mxu0 %v43
    %139 = vmatprep.subr.mxu0 0.0
    %140 = vmatpush1.msra.mxu0 0.0
    %141 = vmatprep.subr.mxu0 0.0
    %142 = vmatpush1.msra.mxu0 0.0
    %143 = vmatprep.subr.mxu0 0.0
    %144 = vmatpush1.msra.mxu0 0.0
    %145 = vmatprep.subr.mxu0 0.0
    %146 = vmatpush1.msra.mxu0 0.0
    %147 = vmatprep.subr.mxu0 0.0
    %148 = vmatpush1.msra.mxu0 0.0
    %149 = vmatprep.subr.mxu0 0.0
    %150 = vmatpush1.msra.mxu0 0.0
    %151 = vmatprep.subr.mxu0 0.0
    %152 = vmatpush1.msra.mxu0 0.0
    %153 = vmatprep.subr.mxu0 0.0
    %154 = vmatpush1.msra.mxu0 0.0
    %155 = vmatprep.subr.mxu0 0.0
    %156 = vmatpush1.msra.mxu0 0.0
    %157 = vmatprep.subr.mxu0 0.0
    %158 = vmatpush1.msra.mxu0 0.0
    %159 = vmatprep.subr.mxu0 0.0
    %160 = vmatpush1.msra.mxu0 0.0
    %161 = vmatprep.subr.mxu0 0.0
    %162 = vmatpush1.msra.mxu0 0.0
    %163 = vmatprep.subr.mxu0 0.0
    %164 = vmatpush1.msra.mxu0 0.0
    %165 = vmatprep.subr.mxu0 0.0
    %166 = vmatpush1.msra.mxu0 0.0
    %167 = vmatprep.subr.mxu0 0.0
    %168 = vmatpush1.msra.mxu0 0.0
    %169 = vmatprep.subr.mxu0 0.0
    %170 = vmatpush1.msra.mxu0 0.0
    %171 = vmatprep.subr.mxu0 0.0
    %172 = vmatpush1.msra.mxu0 0.0
    %173 = vmatprep.subr.mxu0 0.0
    %174 = vmatpush1.msra.mxu0 0.0
    %175 = vmatprep.subr.mxu0 0.0
    %176 = vmatpush1.msra.mxu0 0.0
    %177 = vmatprep.subr.mxu0 0.0
    %178 = vmatpush1.msra.mxu0 0.0
    %179 = vmatprep.subr.mxu0 0.0
    %180 = vmatpush1.msra.mxu0 0.0
    %181 = vmatprep.subr.mxu0 0.0
    %182 = vmatpush1.msra.mxu0 0.0
    %183 = vmatprep.subr.mxu0 0.0
    %184 = vmatpush1.msra.mxu0 0.0
    %185 = vmatprep.subr.mxu0 0.0
    %186 = vmatpush1.msra.mxu0 0.0
    %187 = vmatprep.subr.mxu0 0.0
    %188 = vmatpush1.msra.mxu0 0.0
    %189 = vmatprep.subr.mxu0 0.0
    %190 = vmatpush1.msra.mxu0 0.0
    %191 = vmatprep.subr.mxu0 0.0
    %192 = vmatpush1.msra.mxu0 0.0
    %193 = vmatprep.subr.mxu0 0.0
    %194 = vmatpush1.msra.mxu0 0.0
    %195 = vmatprep.subr.mxu0 0.0
    %196 = vmatpush1.msra.mxu0 0.0
    %197 = vmatprep.subr.mxu0 0.0
    %198 = vmatpush1.msra.mxu0 0.0
    %199 = vmatprep.mubr.f32.mxu0 0.0
    %200 = vmatmul.mubr.f32.gmra.mrb[0].mxu0 %v112
    %v201 = vpop.f32.mrb[0].mxu0
    %v202 = vadd.f32 0.0, %v201
    %v203 = vpop.f32.mrb[0].mxu0
    %204 = vmatprep.mubr.f32.mxu0 0.0
    %205 = vmatmul.mubr.f32.gmra.mrb[0].mxu0 %v115
    %v206 = vpop.f32.mrb[0].mxu0
    %v207 = vadd.f32 0.0, %v206
    %v208 = vpop.f32.mrb[0].mxu0
    %209 = vmatprep.mubr.f32.mxu0 0.0
    %210 = vmatmul.mubr.f32.gmra.mrb[0].mxu0 %v118
    %v211 = vpop.f32.mrb[0].mxu0
    %v212 = vadd.f32 0.0, %v211
    %v213 = vpop.f32.mrb[0].mxu0
    %214 = vmatprep.mubr.f32.mxu0 0.0
    %215 = vmatmul.mubr.f32.gmra.mrb[0].mxu0 %v121
    %v216 = vpop.f32.mrb[0].mxu0
    %v217 = vadd.f32 0.0, %v216
    %v218 = vpop.f32.mrb[0].mxu0
    %219 = vmatprep.mubr.f32.mxu0 0.0
    %220 = vmatmul.mubr.f32.gmra.mrb[0].mxu0 %v124
    %v221 = vpop.f32.mrb[0].mxu0
    %v222 = vadd.f32 0.0, %v221
    %v223 = vpop.f32.mrb[0].mxu0
    %224 = vmatprep.mubr.f32.mxu0 0.0
    %225 = vmatmul.mubr.f32.gmra.mrb[0].mxu0 %v127
    %v226 = vpop.f32.mrb[0].mxu0
    %v227 = vadd.f32 0.0, %v226
    %v228 = vpop.f32.mrb[0].mxu0
    %229 = vmatprep.mubr.f32.mxu0 0.0
    %230 = vmatmul.mubr.f32.gmra.mrb[0].mxu0 %v130
    %v231 = vpop.f32.mrb[0].mxu0
    %v232 = vadd.f32 0.0, %v231
    %v233 = vpop.f32.mrb[0].mxu0
    %234 = vmatprep.mubr.f32.mxu0 0.0
    %235 = vmatmul.mubr.f32.gmra.mrb[0].mxu0 %v133
    %v236 = vpop.f32.mrb[0].mxu0
    %v237 = vadd.f32 0.0, %v236
    %v238 = vpop.f32.mrb[0].mxu0
    %239 = vdwg.mxu0
    %v240 = vlaneseq
    %v241 = vshrl.u32 %v240, 7
    %v242 = vsub.s32 0, %v241
    %v243 = vrot.slane %v48, %v242
    %vm244 = vcmask 261120
    %v246 = vsel %vm244, %v202, 0
    %v249 = vsel %vm244, %v207, 0
    %v252 = vsel %vm244, %v212, 0
    %v255 = vsel %vm244, %v217, 0
    %v258 = vsel %vm244, %v222, 0
    %v261 = vsel %vm244, %v227, 0
    %v264 = vsel %vm244, %v232, 0
    %v267 = vsel %vm244, %v237, 0
    %269 = vmatprep.subr.mxu0 0.0
    %270 = vmatpush1.msra.mxu0 %v44
    %271 = vmatprep.subr.mxu0 0.0
    %272 = vmatpush1.msra.mxu0 %v45
    %273 = vmatprep.subr.mxu0 0.0
    %274 = vmatpush1.msra.mxu0 %v46
    %275 = vmatprep.subr.mxu0 0.0
    %276 = vmatpush1.msra.mxu0 %v47
    %277 = vmatprep.subr.mxu0 0.0
    %278 = vmatpush1.msra.mxu0 0.0
    %279 = vmatprep.subr.mxu0 0.0
    %280 = vmatpush1.msra.mxu0 0.0
    %281 = vmatprep.subr.mxu0 0.0
    %282 = vmatpush1.msra.mxu0 0.0
    %283 = vmatprep.subr.mxu0 0.0
    %284 = vmatpush1.msra.mxu0 0.0
    %285 = vmatprep.subr.mxu0 0.0
    %286 = vmatpush1.msra.mxu0 0.0
    %287 = vmatprep.subr.mxu0 0.0
    %288 = vmatpush1.msra.mxu0 0.0
    %289 = vmatprep.subr.mxu0 0.0
    %290 = vmatpush1.msra.mxu0 0.0
    %291 = vmatprep.subr.mxu0 0.0
    %292 = vmatpush1.msra.mxu0 0.0
    %293 = vmatprep.subr.mxu0 0.0
    %294 = vmatpush1.msra.mxu0 0.0
    %295 = vmatprep.subr.mxu0 0.0
    %296 = vmatpush1.msra.mxu0 0.0
    %297 = vmatprep.subr.mxu0 0.0
    %298 = vmatpush1.msra.mxu0 0.0
    %299 = vmatprep.subr.mxu0 0.0
    %300 = vmatpush1.msra.mxu0 0.0
    %301 = vmatprep.subr.mxu0 0.0
    %302 = vmatpush1.msra.mxu0 0.0
    %303 = vmatprep.subr.mxu0 0.0
    %304 = vmatpush1.msra.mxu0 0.0
    %305 = vmatprep.subr.mxu0 0.0
    %306 = vmatpush1.msra.mxu0 0.0
    %307 = vmatprep.subr.mxu0 0.0
    %308 = vmatpush1.msra.mxu0 0.0
    %309 = vmatprep.subr.mxu0 0.0
    %310 = vmatpush1.msra.mxu0 0.0
    %311 = vmatprep.subr.mxu0 0.0
    %312 = vmatpush1.msra.mxu0 0.0
    %313 = vmatprep.subr.mxu0 0.0
    %314 = vmatpush1.msra.mxu0 0.0
    %315 = vmatprep.subr.mxu0 0.0
    %316 = vmatpush1.msra.mxu0 0.0
    %317 = vmatprep.subr.mxu0 0.0
    %318 = vmatpush1.msra.mxu0 0.0
    %319 = vmatprep.subr.mxu0 0.0
    %320 = vmatpush1.msra.mxu0 0.0
    %321 = vmatprep.subr.mxu0 0.0
    %322 = vmatpush1.msra.mxu0 0.0
    %323 = vmatprep.subr.mxu0 0.0
    %324 = vmatpush1.msra.mxu0 0.0
    %325 = vmatprep.subr.mxu0 0.0
    %326 = vmatpush1.msra.mxu0 0.0
    %327 = vmatprep.subr.mxu0 0.0
    %328 = vmatpush1.msra.mxu0 0.0
    %329 = vmatprep.subr.mxu0 0.0
    %330 = vmatpush1.msra.mxu0 0.0
    %331 = vmatprep.subr.mxu0 0.0
    %332 = vmatpush1.msra.mxu0 0.0
    %333 = vmatprep.mubr.f32.mxu0 0.0
    %334 = vmatmul.mubr.f32.gmra.mrb[0].mxu0 %v246
    %v335 = vpop.f32.mrb[0].mxu0
    %v336 = vadd.f32 %v243, %v335
    %v337 = vpop.f32.mrb[0].mxu0
    %338 = vmatprep.mubr.f32.mxu0 0.0
    %339 = vmatmul.mubr.f32.gmra.mrb[0].mxu0 %v249
    %v340 = vpop.f32.mrb[0].mxu0
    %v341 = vadd.f32 %v243, %v340
    %v342 = vpop.f32.mrb[0].mxu0
    %343 = vmatprep.mubr.f32.mxu0 0.0
    %344 = vmatmul.mubr.f32.gmra.mrb[0].mxu0 %v252
    %v345 = vpop.f32.mrb[0].mxu0
    %v346 = vadd.f32 %v243, %v345
    %v347 = vpop.f32.mrb[0].mxu0
    %348 = vmatprep.mubr.f32.mxu0 0.0
    %349 = vmatmul.mubr.f32.gmra.mrb[0].mxu0 %v255
    %v350 = vpop.f32.mrb[0].mxu0
    %v351 = vadd.f32 %v243, %v350
    %v352 = vpop.f32.mrb[0].mxu0
    %353 = vmatprep.mubr.f32.mxu0 0.0
    %354 = vmatmul.mubr.f32.gmra.mrb[0].mxu0 %v258
    %v355 = vpop.f32.mrb[0].mxu0
    %v356 = vadd.f32 %v243, %v355
    %v357 = vpop.f32.mrb[0].mxu0
    %358 = vmatprep.mubr.f32.mxu0 0.0
    %359 = vmatmul.mubr.f32.gmra.mrb[0].mxu0 %v261
    %v360 = vpop.f32.mrb[0].mxu0
    %v361 = vadd.f32 %v243, %v360
    %v362 = vpop.f32.mrb[0].mxu0
    %363 = vmatprep.mubr.f32.mxu0 0.0
    %364 = vmatmul.mubr.f32.gmra.mrb[0].mxu0 %v264
    %v365 = vpop.f32.mrb[0].mxu0
    %v366 = vadd.f32 %v243, %v365
    %v367 = vpop.f32.mrb[0].mxu0
    %368 = vmatprep.mubr.f32.mxu0 0.0
    %369 = vmatmul.mubr.f32.gmra.mrb[0].mxu0 %v267
    %v370 = vpop.f32.mrb[0].mxu0
    %v371 = vadd.f32 %v243, %v370
    %v372 = vpop.f32.mrb[0].mxu0
    %373 = vdwg.mxu0
    %v374 = vmul.f32 %v336, %v78
    %v375 = vmul.f32 %v341, %v79
    %v376 = vmul.f32 %v346, %v80
    %v377 = vmul.f32 %v351, %v81
    %v378 = vmul.f32 %v356, %v82
    %v379 = vmul.f32 %v361, %v83
    %v380 = vmul.f32 %v366, %v84
    %v381 = vmul.f32 %v371, %v85
    %390 = vrot.lane.b32.xlu0 %v374, 96
    %v391 = vpop.permute.xlu0 %390
    %392 = vrot.lane.b32.xlu0 %v375, 96
    %v393 = vpop.permute.xlu0 %392
    %394 = vrot.lane.b32.xlu0 %v376, 96
    %v395 = vpop.permute.xlu0 %394
    %396 = vrot.lane.b32.xlu0 %v377, 96
    %v397 = vpop.permute.xlu0 %396
    %398 = vrot.lane.b32.xlu0 %v378, 96
    %v399 = vpop.permute.xlu0 %398
    %400 = vrot.lane.b32.xlu0 %v379, 96
    %v401 = vpop.permute.xlu0 %400
    %402 = vrot.lane.b32.xlu0 %v380, 96
    %v403 = vpop.permute.xlu0 %402
    %404 = vrot.lane.b32.xlu0 %v381, 96
    %v405 = vpop.permute.xlu0 %404
    %v406 = vsel %vm244, %v374, 0
    %v408 = vsel %vm244, %v375, 0
    %v410 = vsel %vm244, %v376, 0
    %v412 = vsel %vm244, %v377, 0
    %v414 = vsel %vm244, %v378, 0
    %v416 = vsel %vm244, %v379, 0
    %v418 = vsel %vm244, %v380, 0
    %v420 = vsel %vm244, %v381, 0
    %v422 = vsel %vm244, %v391, 0
    %v424 = vsel %vm244, %v393, 0
    %v426 = vsel %vm244, %v395, 0
    %v428 = vsel %vm244, %v397, 0
    %v430 = vsel %vm244, %v399, 0
    %v432 = vsel %vm244, %v401, 0
    %v434 = vsel %vm244, %v403, 0
    %v436 = vsel %vm244, %v405, 0
    %438 = vmatprep.subr.mxu0 0.0
    %439 = vmatpush1.xpose.msra.mxu0 %v422
    %440 = vmatprep.subr.mxu0 0.0
    %441 = vmatpush1.xpose.msra.mxu0 %v424
    %442 = vmatprep.subr.mxu0 0.0
    %443 = vmatpush1.xpose.msra.mxu0 %v426
    %444 = vmatprep.subr.mxu0 0.0
    %445 = vmatpush1.xpose.msra.mxu0 %v428
    %446 = vmatprep.subr.mxu0 0.0
    %447 = vmatpush1.xpose.msra.mxu0 %v430
    %448 = vmatprep.subr.mxu0 0.0
    %449 = vmatpush1.xpose.msra.mxu0 %v432
    %450 = vmatprep.subr.mxu0 0.0
    %451 = vmatpush1.xpose.msra.mxu0 %v434
    %452 = vmatprep.subr.mxu0 0.0
    %453 = vmatpush1.xpose.msra.mxu0 %v436
    %454 = vmatprep.subr.mxu0 0.0
    %455 = vmatpush1.xpose.msra.mxu0 0.0
    %456 = vmatprep.subr.mxu0 0.0
    %457 = vmatpush1.xpose.msra.mxu0 0.0
    %458 = vmatprep.subr.mxu0 0.0
    %459 = vmatpush1.xpose.msra.mxu0 0.0
    %460 = vmatprep.subr.mxu0 0.0
    %461 = vmatpush1.xpose.msra.mxu0 0.0
    %462 = vmatprep.subr.mxu0 0.0
    %463 = vmatpush1.xpose.msra.mxu0 0.0
    %464 = vmatprep.subr.mxu0 0.0
    %465 = vmatpush1.xpose.msra.mxu0 0.0
    %466 = vmatprep.subr.mxu0 0.0
    %467 = vmatpush1.xpose.msra.mxu0 0.0
    %468 = vmatprep.subr.mxu0 0.0
    %469 = vmatpush1.xpose.msra.mxu0 0.0
    %470 = vmatprep.subr.mxu0 0.0
    %471 = vmatpush1.xpose.msra.mxu0 0.0
    %472 = vmatprep.subr.mxu0 0.0
    %473 = vmatpush1.xpose.msra.mxu0 0.0
    %474 = vmatprep.subr.mxu0 0.0
    %475 = vmatpush1.xpose.msra.mxu0 0.0
    %476 = vmatprep.subr.mxu0 0.0
    %477 = vmatpush1.xpose.msra.mxu0 0.0
    %478 = vmatprep.subr.mxu0 0.0
    %479 = vmatpush1.xpose.msra.mxu0 0.0
    %480 = vmatprep.subr.mxu0 0.0
    %481 = vmatpush1.xpose.msra.mxu0 0.0
    %482 = vmatprep.subr.mxu0 0.0
    %483 = vmatpush1.xpose.msra.mxu0 0.0
    %484 = vmatprep.subr.mxu0 0.0
    %485 = vmatpush1.xpose.msra.mxu0 0.0
    %486 = vmatprep.subr.mxu0 0.0
    %487 = vmatpush1.xpose.msra.mxu0 0.0
    %488 = vmatprep.subr.mxu0 0.0
    %489 = vmatpush1.xpose.msra.mxu0 0.0
    %490 = vmatprep.subr.mxu0 0.0
    %491 = vmatpush1.xpose.msra.mxu0 0.0
    %492 = vmatprep.subr.mxu0 0.0
    %493 = vmatpush1.xpose.msra.mxu0 0.0
    %494 = vmatprep.subr.mxu0 0.0
    %495 = vmatpush1.xpose.msra.mxu0 0.0
    %496 = vmatprep.subr.mxu0 0.0
    %497 = vmatpush1.xpose.msra.mxu0 0.0
    %498 = vmatprep.subr.mxu0 0.0
    %499 = vmatpush1.xpose.msra.mxu0 0.0
    %500 = vmatprep.subr.mxu0 0.0
    %501 = vmatpush1.xpose.msra.mxu0 0.0
    %502 = vmatprep.mubr.f32.mxu0 0.0
    %503 = vmatmul.mubr.f32.gmra.mrb[0].mxu0 %v406
    %v504 = vpop.f32.mrb[0].mxu0
    %v505 = vadd.f32 %v86, %v504
    %v506 = vpop.f32.mrb[0].mxu0
    %507 = vmatprep.mubr.f32.mxu0 0.0
    %508 = vmatmul.mubr.f32.gmra.mrb[0].mxu0 %v408
    %v509 = vpop.f32.mrb[0].mxu0
    %v510 = vadd.f32 %v87, %v509
    %v511 = vpop.f32.mrb[0].mxu0
    %512 = vmatprep.mubr.f32.mxu0 0.0
    %513 = vmatmul.mubr.f32.gmra.mrb[0].mxu0 %v410
    %v514 = vpop.f32.mrb[0].mxu0
    %v515 = vadd.f32 %v88, %v514
    %v516 = vpop.f32.mrb[0].mxu0
    %517 = vmatprep.mubr.f32.mxu0 0.0
    %518 = vmatmul.mubr.f32.gmra.mrb[0].mxu0 %v412
    %v519 = vpop.f32.mrb[0].mxu0
    %v520 = vadd.f32 %v89, %v519
    %v521 = vpop.f32.mrb[0].mxu0
    %522 = vmatprep.mubr.f32.mxu0 0.0
    %523 = vmatmul.mubr.f32.gmra.mrb[0].mxu0 %v414
    %v524 = vpop.f32.mrb[0].mxu0
    %v525 = vadd.f32 %v90, %v524
    %v526 = vpop.f32.mrb[0].mxu0
    %527 = vmatprep.mubr.f32.mxu0 0.0
    %528 = vmatmul.mubr.f32.gmra.mrb[0].mxu0 %v416
    %v529 = vpop.f32.mrb[0].mxu0
    %v530 = vadd.f32 %v91, %v529
    %v531 = vpop.f32.mrb[0].mxu0
    %532 = vmatprep.mubr.f32.mxu0 0.0
    %533 = vmatmul.mubr.f32.gmra.mrb[0].mxu0 %v418
    %v534 = vpop.f32.mrb[0].mxu0
    %v535 = vadd.f32 %v92, %v534
    %v536 = vpop.f32.mrb[0].mxu0
    %537 = vmatprep.mubr.f32.mxu0 0.0
    %538 = vmatmul.mubr.f32.gmra.mrb[0].mxu0 %v420
    %v539 = vpop.f32.mrb[0].mxu0
    %v540 = vadd.f32 %v93, %v539
    %v541 = vpop.f32.mrb[0].mxu0
    %542 = vdwg.mxu0
    %vm543 = vcmask 523264
    %v544 = vsel %vm543, %v505, -inf
    %545 = vmax.xlane.f32.xlu0 %v544
    %v546 = vpop.xlane.xlu0 %545
    %v547 = vsel %vm543, %v510, -inf
    %548 = vmax.xlane.f32.xlu0 %v547
    %v549 = vpop.xlane.xlu0 %548
    %v550 = vsel %vm543, %v515, -inf
    %551 = vmax.xlane.f32.xlu0 %v550
    %v552 = vpop.xlane.xlu0 %551
    %v553 = vsel %vm543, %v520, -inf
    %554 = vmax.xlane.f32.xlu0 %v553
    %v555 = vpop.xlane.xlu0 %554
    %v556 = vsel %vm543, %v525, -inf
    %557 = vmax.xlane.f32.xlu0 %v556
    %v558 = vpop.xlane.xlu0 %557
    %v559 = vsel %vm543, %v530, -inf
    %560 = vmax.xlane.f32.xlu0 %v559
    %v561 = vpop.xlane.xlu0 %560
    %v562 = vsel %vm543, %v535, -inf
    %563 = vmax.xlane.f32.xlu0 %v562
    %v564 = vpop.xlane.xlu0 %563
    %v565 = vsel %vm543, %v540, -inf
    %566 = vmax.xlane.f32.xlu0 %v565
    %v567 = vpop.xlane.xlu0 %566
    %v568 = vsub.f32 %v505, %v546
    %v569 = vsub.f32 %v510, %v549
    %v570 = vsub.f32 %v515, %v552
    %v571 = vsub.f32 %v520, %v555
    %v572 = vsub.f32 %v525, %v558
    %v573 = vsub.f32 %v530, %v561
    %v574 = vsub.f32 %v535, %v564
    %v575 = vsub.f32 %v540, %v567
    %v576 = vmul.f32 %v568, 1.442695
    %v577 = vpow.pop %v576
    %v578 = vmul.f32 %v569, 1.442695
    %v579 = vpow.pop %v578
    %v580 = vmul.f32 %v570, 1.442695
    %v581 = vpow.pop %v580
    %v582 = vmul.f32 %v571, 1.442695
    %v583 = vpow.pop %v582
    %v584 = vmul.f32 %v572, 1.442695
    %v585 = vpow.pop %v584
    %v586 = vmul.f32 %v573, 1.442695
    %v587 = vpow.pop %v586
    %v588 = vmul.f32 %v574, 1.442695
    %v589 = vpow.pop %v588
    %v590 = vmul.f32 %v575, 1.442695
    %v591 = vpow.pop %v590
    %v592 = vmul.f32 %v577, %v94
    %v593 = vmul.f32 %v579, %v95
    %v594 = vmul.f32 %v581, %v96
    %v595 = vmul.f32 %v583, %v97
    %v596 = vmul.f32 %v585, %v98
    %v597 = vmul.f32 %v587, %v99
    %v598 = vmul.f32 %v589, %v100
    %v599 = vmul.f32 %v591, %v101
    %v600 = vsel %vm543, %v592, 0.0
    %601 = vadd.xlane.f32.xlu0 %v600
    %v602 = vpop.xlane.xlu0 %601
    %v603 = vsel %vm543, %v593, 0.0
    %604 = vadd.xlane.f32.xlu0 %v603
    %v605 = vpop.xlane.xlu0 %604
    %v606 = vsel %vm543, %v594, 0.0
    %607 = vadd.xlane.f32.xlu0 %v606
    %v608 = vpop.xlane.xlu0 %607
    %v609 = vsel %vm543, %v595, 0.0
    %610 = vadd.xlane.f32.xlu0 %v609
    %v611 = vpop.xlane.xlu0 %610
    %v612 = vsel %vm543, %v596, 0.0
    %613 = vadd.xlane.f32.xlu0 %v612
    %v614 = vpop.xlane.xlu0 %613
    %v615 = vsel %vm543, %v597, 0.0
    %616 = vadd.xlane.f32.xlu0 %v615
    %v617 = vpop.xlane.xlu0 %616
    %v618 = vsel %vm543, %v598, 0.0
    %619 = vadd.xlane.f32.xlu0 %v618
    %v620 = vpop.xlane.xlu0 %619
    %v621 = vsel %vm543, %v599, 0.0
    %622 = vadd.xlane.f32.xlu0 %v621
    %v623 = vpop.xlane.xlu0 %622
    %v624 = vrcp.pop %v602
    %v625 = vrcp.pop %v605
    %v626 = vrcp.pop %v608
    %v627 = vrcp.pop %v611
    %v628 = vrcp.pop %v614
    %v629 = vrcp.pop %v617
    %v630 = vrcp.pop %v620
    %v631 = vrcp.pop %v623
    %v632 = vmul.f32 %v602, %v624
    %v633 = vmul.f32 %v605, %v625
    %v634 = vmul.f32 %v608, %v626
    %v635 = vmul.f32 %v611, %v627
    %v636 = vmul.f32 %v614, %v628
    %v637 = vmul.f32 %v617, %v629
    %v638 = vmul.f32 %v620, %v630
    %v639 = vmul.f32 %v623, %v631
    %v640 = vsub.f32 2.0, %v632
    %v641 = vsub.f32 2.0, %v633
    %v642 = vsub.f32 2.0, %v634
    %v643 = vsub.f32 2.0, %v635
    %v644 = vsub.f32 2.0, %v636
    %v645 = vsub.f32 2.0, %v637
    %v646 = vsub.f32 2.0, %v638
    %v647 = vsub.f32 2.0, %v639
    %v648 = vmul.f32 %v624, %v640
    %v649 = vmul.f32 %v625, %v641
    %v650 = vmul.f32 %v626, %v642
    %v651 = vmul.f32 %v627, %v643
    %v652 = vmul.f32 %v628, %v644
    %v653 = vmul.f32 %v629, %v645
    %v654 = vmul.f32 %v630, %v646
    %v655 = vmul.f32 %v631, %v647
    %v656 = vmul.f32 %v592, %v648
    %v657 = vmul.f32 %v593, %v649
    %v658 = vmul.f32 %v594, %v650
    %v659 = vmul.f32 %v595, %v651
    %v660 = vmul.f32 %v596, %v652
    %v661 = vmul.f32 %v597, %v653
    %v662 = vmul.f32 %v598, %v654
    %v663 = vmul.f32 %v599, %v655
    %664 = vrot.lane.b32.xlu0 %v374, 64
    %v665 = vpop.permute.xlu0 %664
    %666 = vrot.lane.b32.xlu0 %v375, 64
    %v667 = vpop.permute.xlu0 %666
    %668 = vrot.lane.b32.xlu0 %v376, 64
    %v669 = vpop.permute.xlu0 %668
    %670 = vrot.lane.b32.xlu0 %v377, 64
    %v671 = vpop.permute.xlu0 %670
    %672 = vrot.lane.b32.xlu0 %v378, 64
    %v673 = vpop.permute.xlu0 %672
    %674 = vrot.lane.b32.xlu0 %v379, 64
    %v675 = vpop.permute.xlu0 %674
    %676 = vrot.lane.b32.xlu0 %v380, 64
    %v677 = vpop.permute.xlu0 %676
    %678 = vrot.lane.b32.xlu0 %v381, 64
    %v679 = vpop.permute.xlu0 %678
    %v689 = vsel %vm543, %v656, 0
    %v692 = vsel %vm543, %v657, 0
    %v695 = vsel %vm543, %v658, 0
    %v698 = vsel %vm543, %v659, 0
    %v701 = vsel %vm543, %v660, 0
    %v704 = vsel %vm543, %v661, 0
    %v707 = vsel %vm543, %v662, 0
    %v710 = vsel %vm543, %v663, 0
    %712 = vmatprep.subr.mxu0 0.0
    %713 = vmatpush1.msra.mxu0 %v665
    %714 = vmatprep.subr.mxu0 0.0
    %715 = vmatpush1.msra.mxu0 %v667
    %716 = vmatprep.subr.mxu0 0.0
    %717 = vmatpush1.msra.mxu0 %v669
    %718 = vmatprep.subr.mxu0 0.0
    %719 = vmatpush1.msra.mxu0 %v671
    %720 = vmatprep.subr.mxu0 0.0
    %721 = vmatpush1.msra.mxu0 %v673
    %722 = vmatprep.subr.mxu0 0.0
    %723 = vmatpush1.msra.mxu0 %v675
    %724 = vmatprep.subr.mxu0 0.0
    %725 = vmatpush1.msra.mxu0 %v677
    %726 = vmatprep.subr.mxu0 0.0
    %727 = vmatpush1.msra.mxu0 %v679
    %728 = vmatprep.subr.mxu0 0.0
    %729 = vmatpush1.msra.mxu0 0.0
    %730 = vmatprep.subr.mxu0 0.0
    %731 = vmatpush1.msra.mxu0 0.0
    %732 = vmatprep.subr.mxu0 0.0
    %733 = vmatpush1.msra.mxu0 0.0
    %734 = vmatprep.subr.mxu0 0.0
    %735 = vmatpush1.msra.mxu0 0.0
    %736 = vmatprep.subr.mxu0 0.0
    %737 = vmatpush1.msra.mxu0 0.0
    %738 = vmatprep.subr.mxu0 0.0
    %739 = vmatpush1.msra.mxu0 0.0
    %740 = vmatprep.subr.mxu0 0.0
    %741 = vmatpush1.msra.mxu0 0.0
    %742 = vmatprep.subr.mxu0 0.0
    %743 = vmatpush1.msra.mxu0 0.0
    %744 = vmatprep.subr.mxu0 0.0
    %745 = vmatpush1.msra.mxu0 0.0
    %746 = vmatprep.subr.mxu0 0.0
    %747 = vmatpush1.msra.mxu0 0.0
    %748 = vmatprep.subr.mxu0 0.0
    %749 = vmatpush1.msra.mxu0 0.0
    %750 = vmatprep.subr.mxu0 0.0
    %751 = vmatpush1.msra.mxu0 0.0
    %752 = vmatprep.subr.mxu0 0.0
    %753 = vmatpush1.msra.mxu0 0.0
    %754 = vmatprep.subr.mxu0 0.0
    %755 = vmatpush1.msra.mxu0 0.0
    %756 = vmatprep.subr.mxu0 0.0
    %757 = vmatpush1.msra.mxu0 0.0
    %758 = vmatprep.subr.mxu0 0.0
    %759 = vmatpush1.msra.mxu0 0.0
    %760 = vmatprep.subr.mxu0 0.0
    %761 = vmatpush1.msra.mxu0 0.0
    %762 = vmatprep.subr.mxu0 0.0
    %763 = vmatpush1.msra.mxu0 0.0
    %764 = vmatprep.subr.mxu0 0.0
    %765 = vmatpush1.msra.mxu0 0.0
    %766 = vmatprep.subr.mxu0 0.0
    %767 = vmatpush1.msra.mxu0 0.0
    %768 = vmatprep.subr.mxu0 0.0
    %769 = vmatpush1.msra.mxu0 0.0
    %770 = vmatprep.subr.mxu0 0.0
    %771 = vmatpush1.msra.mxu0 0.0
    %772 = vmatprep.subr.mxu0 0.0
    %773 = vmatpush1.msra.mxu0 0.0
    %774 = vmatprep.subr.mxu0 0.0
    %775 = vmatpush1.msra.mxu0 0.0
    %776 = vmatprep.mubr.f32.mxu0 0.0
    %777 = vmatmul.mubr.f32.gmra.mrb[0].mxu0 %v689
    %v778 = vpop.f32.mrb[0].mxu0
    %v779 = vadd.f32 0.0, %v778
    %v780 = vpop.f32.mrb[0].mxu0
    %781 = vmatprep.mubr.f32.mxu0 0.0
    %782 = vmatmul.mubr.f32.gmra.mrb[0].mxu0 %v692
    %v783 = vpop.f32.mrb[0].mxu0
    %v784 = vadd.f32 0.0, %v783
    %v785 = vpop.f32.mrb[0].mxu0
    %786 = vmatprep.mubr.f32.mxu0 0.0
    %787 = vmatmul.mubr.f32.gmra.mrb[0].mxu0 %v695
    %v788 = vpop.f32.mrb[0].mxu0
    %v789 = vadd.f32 0.0, %v788
    %v790 = vpop.f32.mrb[0].mxu0
    %791 = vmatprep.mubr.f32.mxu0 0.0
    %792 = vmatmul.mubr.f32.gmra.mrb[0].mxu0 %v698
    %v793 = vpop.f32.mrb[0].mxu0
    %v794 = vadd.f32 0.0, %v793
    %v795 = vpop.f32.mrb[0].mxu0
    %796 = vmatprep.mubr.f32.mxu0 0.0
    %797 = vmatmul.mubr.f32.gmra.mrb[0].mxu0 %v701
    %v798 = vpop.f32.mrb[0].mxu0
    %v799 = vadd.f32 0.0, %v798
    %v800 = vpop.f32.mrb[0].mxu0
    %801 = vmatprep.mubr.f32.mxu0 0.0
    %802 = vmatmul.mubr.f32.gmra.mrb[0].mxu0 %v704
    %v803 = vpop.f32.mrb[0].mxu0
    %v804 = vadd.f32 0.0, %v803
    %v805 = vpop.f32.mrb[0].mxu0
    %806 = vmatprep.mubr.f32.mxu0 0.0
    %807 = vmatmul.mubr.f32.gmra.mrb[0].mxu0 %v707
    %v808 = vpop.f32.mrb[0].mxu0
    %v809 = vadd.f32 0.0, %v808
    %v810 = vpop.f32.mrb[0].mxu0
    %811 = vmatprep.mubr.f32.mxu0 0.0
    %812 = vmatmul.mubr.f32.gmra.mrb[0].mxu0 %v710
    %v813 = vpop.f32.mrb[0].mxu0
    %v814 = vadd.f32 0.0, %v813
    %v815 = vpop.f32.mrb[0].mxu0
    %816 = vdwg.mxu0
    %v818 = vsel %vm543, %v76, 0
    %v821 = vsel %vm543, %v77, 0
    %823 = vmatprep.subr.mxu0 0.0
    %824 = vmatpush1.msra.mxu0 %v779
    %825 = vmatprep.subr.mxu0 0.0
    %826 = vmatpush1.msra.mxu0 %v784
    %827 = vmatprep.subr.mxu0 0.0
    %828 = vmatpush1.msra.mxu0 %v789
    %829 = vmatprep.subr.mxu0 0.0
    %830 = vmatpush1.msra.mxu0 %v794
    %831 = vmatprep.subr.mxu0 0.0
    %832 = vmatpush1.msra.mxu0 %v799
    %833 = vmatprep.subr.mxu0 0.0
    %834 = vmatpush1.msra.mxu0 %v804
    %835 = vmatprep.subr.mxu0 0.0
    %836 = vmatpush1.msra.mxu0 %v809
    %837 = vmatprep.subr.mxu0 0.0
    %838 = vmatpush1.msra.mxu0 %v814
    %839 = vmatprep.subr.mxu0 0.0
    %840 = vmatpush1.msra.mxu0 0.0
    %841 = vmatprep.subr.mxu0 0.0
    %842 = vmatpush1.msra.mxu0 0.0
    %843 = vmatprep.subr.mxu0 0.0
    %844 = vmatpush1.msra.mxu0 0.0
    %845 = vmatprep.subr.mxu0 0.0
    %846 = vmatpush1.msra.mxu0 0.0
    %847 = vmatprep.subr.mxu0 0.0
    %848 = vmatpush1.msra.mxu0 0.0
    %849 = vmatprep.subr.mxu0 0.0
    %850 = vmatpush1.msra.mxu0 0.0
    %851 = vmatprep.subr.mxu0 0.0
    %852 = vmatpush1.msra.mxu0 0.0
    %853 = vmatprep.subr.mxu0 0.0
    %854 = vmatpush1.msra.mxu0 0.0
    %855 = vmatprep.subr.mxu0 0.0
    %856 = vmatpush1.msra.mxu0 0.0
    %857 = vmatprep.subr.mxu0 0.0
    %858 = vmatpush1.msra.mxu0 0.0
    %859 = vmatprep.subr.mxu0 0.0
    %860 = vmatpush1.msra.mxu0 0.0
    %861 = vmatprep.subr.mxu0 0.0
    %862 = vmatpush1.msra.mxu0 0.0
    %863 = vmatprep.subr.mxu0 0.0
    %864 = vmatpush1.msra.mxu0 0.0
    %865 = vmatprep.subr.mxu0 0.0
    %866 = vmatpush1.msra.mxu0 0.0
    %867 = vmatprep.subr.mxu0 0.0
    %868 = vmatpush1.msra.mxu0 0.0
    %869 = vmatprep.subr.mxu0 0.0
    %870 = vmatpush1.msra.mxu0 0.0
    %871 = vmatprep.subr.mxu0 0.0
    %872 = vmatpush1.msra.mxu0 0.0
    %873 = vmatprep.subr.mxu0 0.0
    %874 = vmatpush1.msra.mxu0 0.0
    %875 = vmatprep.subr.mxu0 0.0
    %876 = vmatpush1.msra.mxu0 0.0
    %877 = vmatprep.subr.mxu0 0.0
    %878 = vmatpush1.msra.mxu0 0.0
    %879 = vmatprep.subr.mxu0 0.0
    %880 = vmatpush1.msra.mxu0 0.0
    %881 = vmatprep.subr.mxu0 0.0
    %882 = vmatpush1.msra.mxu0 0.0
    %883 = vmatprep.subr.mxu0 0.0
    %884 = vmatpush1.msra.mxu0 0.0
    %885 = vmatprep.subr.mxu0 0.0
    %886 = vmatpush1.msra.mxu0 0.0
    %887 = vmatprep.mubr.f32.mxu0 0.0
    %888 = vmatmul.mubr.f32.gmra.mrb[0].mxu0 %v818
    %v889 = vpop.f32.mrb[0].mxu0
    %v890 = vadd.f32 0.0, %v889
    %v891 = vpop.f32.mrb[0].mxu0
    %892 = vmatprep.mubr.f32.mxu0 0.0
    %893 = vmatmul.mubr.f32.gmra.mrb[0].mxu0 %v821
    %v894 = vpop.f32.mrb[0].mxu0
    %v895 = vadd.f32 0.0, %v894
    %v896 = vpop.f32.mrb[0].mxu0
    %897 = vdwg.mxu0
    %v898 = vlaneseq
    %v899 = vshrl.u32 %v898, 7
    %v900 = vsub.s32 0, %v899
    %v901 = vrot.slane %v53, %v900
    %v903 = vsel %vm244, %v890, 0
    %v906 = vsel %vm244, %v895, 0
    %908 = vmatprep.subr.mxu0 0.0
    %909 = vmatpush1.msra.mxu0 %v49
    %910 = vmatprep.subr.mxu0 0.0
    %911 = vmatpush1.msra.mxu0 %v50
    %912 = vmatprep.subr.mxu0 0.0
    %913 = vmatpush1.msra.mxu0 %v51
    %914 = vmatprep.subr.mxu0 0.0
    %915 = vmatpush1.msra.mxu0 %v52
    %916 = vmatprep.subr.mxu0 0.0
    %917 = vmatpush1.msra.mxu0 0.0
    %918 = vmatprep.subr.mxu0 0.0
    %919 = vmatpush1.msra.mxu0 0.0
    %920 = vmatprep.subr.mxu0 0.0
    %921 = vmatpush1.msra.mxu0 0.0
    %922 = vmatprep.subr.mxu0 0.0
    %923 = vmatpush1.msra.mxu0 0.0
    %924 = vmatprep.subr.mxu0 0.0
    %925 = vmatpush1.msra.mxu0 0.0
    %926 = vmatprep.subr.mxu0 0.0
    %927 = vmatpush1.msra.mxu0 0.0
    %928 = vmatprep.subr.mxu0 0.0
    %929 = vmatpush1.msra.mxu0 0.0
    %930 = vmatprep.subr.mxu0 0.0
    %931 = vmatpush1.msra.mxu0 0.0
    %932 = vmatprep.subr.mxu0 0.0
    %933 = vmatpush1.msra.mxu0 0.0
    %934 = vmatprep.subr.mxu0 0.0
    %935 = vmatpush1.msra.mxu0 0.0
    %936 = vmatprep.subr.mxu0 0.0
    %937 = vmatpush1.msra.mxu0 0.0
    %938 = vmatprep.subr.mxu0 0.0
    %939 = vmatpush1.msra.mxu0 0.0
    %940 = vmatprep.subr.mxu0 0.0
    %941 = vmatpush1.msra.mxu0 0.0
    %942 = vmatprep.subr.mxu0 0.0
    %943 = vmatpush1.msra.mxu0 0.0
    %944 = vmatprep.subr.mxu0 0.0
    %945 = vmatpush1.msra.mxu0 0.0
    %946 = vmatprep.subr.mxu0 0.0
    %947 = vmatpush1.msra.mxu0 0.0
    %948 = vmatprep.subr.mxu0 0.0
    %949 = vmatpush1.msra.mxu0 0.0
    %950 = vmatprep.subr.mxu0 0.0
    %951 = vmatpush1.msra.mxu0 0.0
    %952 = vmatprep.subr.mxu0 0.0
    %953 = vmatpush1.msra.mxu0 0.0
    %954 = vmatprep.subr.mxu0 0.0
    %955 = vmatpush1.msra.mxu0 0.0
    %956 = vmatprep.subr.mxu0 0.0
    %957 = vmatpush1.msra.mxu0 0.0
    %958 = vmatprep.subr.mxu0 0.0
    %959 = vmatpush1.msra.mxu0 0.0
    %960 = vmatprep.subr.mxu0 0.0
    %961 = vmatpush1.msra.mxu0 0.0
    %962 = vmatprep.subr.mxu0 0.0
    %963 = vmatpush1.msra.mxu0 0.0
    %964 = vmatprep.subr.mxu0 0.0
    %965 = vmatpush1.msra.mxu0 0.0
    %966 = vmatprep.subr.mxu0 0.0
    %967 = vmatpush1.msra.mxu0 0.0
    %968 = vmatprep.subr.mxu0 0.0
    %969 = vmatpush1.msra.mxu0 0.0
    %970 = vmatprep.subr.mxu0 0.0
    %971 = vmatpush1.msra.mxu0 0.0
    %972 = vmatprep.mubr.f32.mxu0 0.0
    %973 = vmatmul.mubr.f32.gmra.mrb[0].mxu0 %v903
    %v974 = vpop.f32.mrb[0].mxu0
    %v975 = vadd.f32 %v901, %v974
    %v976 = vpop.f32.mrb[0].mxu0
    %977 = vmatprep.mubr.f32.mxu0 0.0
    %978 = vmatmul.mubr.f32.gmra.mrb[0].mxu0 %v906
    %v979 = vpop.f32.mrb[0].mxu0
    %v980 = vadd.f32 %v901, %v979
    %v981 = vpop.f32.mrb[0].mxu0
    %982 = vdwg.mxu0
    %v983 = vadd.f32 %v975, %v42
    %v984 = vadd.f32 %v980, %v43
    %v985 = vlaneseq
    %v986 = vshrl.u32 %v985, 7
    %v987 = vsub.s32 0, %v986
    %v988 = vrot.slane %v58, %v987
    %v990 = vsel %vm244, %v983, 0
    %v993 = vsel %vm244, %v984, 0
    %995 = vmatprep.subr.mxu0 0.0
    %996 = vmatpush1.msra.mxu0 %v54
    %997 = vmatprep.subr.mxu0 0.0
    %998 = vmatpush1.msra.mxu0 %v55
    %999 = vmatprep.subr.mxu0 0.0
    %1000 = vmatpush1.msra.mxu0 %v56
    %1001 = vmatprep.subr.mxu0 0.0
    %1002 = vmatpush1.msra.mxu0 %v57
    %1003 = vmatprep.subr.mxu0 0.0
    %1004 = vmatpush1.msra.mxu0 0.0
    %1005 = vmatprep.subr.mxu0 0.0
    %1006 = vmatpush1.msra.mxu0 0.0
    %1007 = vmatprep.subr.mxu0 0.0
    %1008 = vmatpush1.msra.mxu0 0.0
    %1009 = vmatprep.subr.mxu0 0.0
    %1010 = vmatpush1.msra.mxu0 0.0
    %1011 = vmatprep.subr.mxu0 0.0
    %1012 = vmatpush1.msra.mxu0 0.0
    %1013 = vmatprep.subr.mxu0 0.0
    %1014 = vmatpush1.msra.mxu0 0.0
    %1015 = vmatprep.subr.mxu0 0.0
    %1016 = vmatpush1.msra.mxu0 0.0
    %1017 = vmatprep.subr.mxu0 0.0
    %1018 = vmatpush1.msra.mxu0 0.0
    %1019 = vmatprep.subr.mxu0 0.0
    %1020 = vmatpush1.msra.mxu0 0.0
    %1021 = vmatprep.subr.mxu0 0.0
    %1022 = vmatpush1.msra.mxu0 0.0
    %1023 = vmatprep.subr.mxu0 0.0
    %1024 = vmatpush1.msra.mxu0 0.0
    %1025 = vmatprep.subr.mxu0 0.0
    %1026 = vmatpush1.msra.mxu0 0.0
    %1027 = vmatprep.subr.mxu0 0.0
    %1028 = vmatpush1.msra.mxu0 0.0
    %1029 = vmatprep.subr.mxu0 0.0
    %1030 = vmatpush1.msra.mxu0 0.0
    %1031 = vmatprep.subr.mxu0 0.0
    %1032 = vmatpush1.msra.mxu0 0.0
    %1033 = vmatprep.subr.mxu0 0.0
    %1034 = vmatpush1.msra.mxu0 0.0
    %1035 = vmatprep.subr.mxu0 0.0
    %1036 = vmatpush1.msra.mxu0 0.0
    %1037 = vmatprep.subr.mxu0 0.0
    %1038 = vmatpush1.msra.mxu0 0.0
    %1039 = vmatprep.subr.mxu0 0.0
    %1040 = vmatpush1.msra.mxu0 0.0
    %1041 = vmatprep.subr.mxu0 0.0
    %1042 = vmatpush1.msra.mxu0 0.0
    %1043 = vmatprep.subr.mxu0 0.0
    %1044 = vmatpush1.msra.mxu0 0.0
    %1045 = vmatprep.subr.mxu0 0.0
    %1046 = vmatpush1.msra.mxu0 0.0
    %1047 = vmatprep.subr.mxu0 0.0
    %1048 = vmatpush1.msra.mxu0 0.0
    %1049 = vmatprep.subr.mxu0 0.0
    %1050 = vmatpush1.msra.mxu0 0.0
    %1051 = vmatprep.subr.mxu0 0.0
    %1052 = vmatpush1.msra.mxu0 0.0
    %1053 = vmatprep.subr.mxu0 0.0
    %1054 = vmatpush1.msra.mxu0 0.0
    %1055 = vmatprep.subr.mxu0 0.0
    %1056 = vmatpush1.msra.mxu0 0.0
    %1057 = vmatprep.subr.mxu0 0.0
    %1058 = vmatpush1.msra.mxu0 0.0
    %1059 = vmatprep.mubr.f32.mxu0 0.0
    %1060 = vmatmul.mubr.f32.gmra.mrb[0].mxu0 %v990
    %v1061 = vpop.f32.mrb[0].mxu0
    %v1062 = vadd.f32 %v988, %v1061
    %v1063 = vpop.f32.mrb[0].mxu0
    %1064 = vmatprep.mubr.f32.mxu0 0.0
    %1065 = vmatmul.mubr.f32.gmra.mrb[0].mxu0 %v993
    %v1066 = vpop.f32.mrb[0].mxu0
    %v1067 = vadd.f32 %v988, %v1066
    %v1068 = vpop.f32.mrb[0].mxu0
    %1069 = vdwg.mxu0
    %v1070 = vmax.f32 %v1062, 0.0
    %v1071 = vmax.f32 %v1067, 0.0
    %v1072 = vlaneseq
    %v1073 = vshrl.u32 %v1072, 7
    %v1074 = vsub.s32 0, %v1073
    %v1075 = vrot.slane %v67, %v1074
    %v1077 = vsel %vm543, %v1070, 0
    %v1080 = vsel %vm543, %v1071, 0
    %1082 = vmatprep.subr.mxu0 0.0
    %1083 = vmatpush1.msra.mxu0 %v59
    %1084 = vmatprep.subr.mxu0 0.0
    %1085 = vmatpush1.msra.mxu0 %v60
    %1086 = vmatprep.subr.mxu0 0.0
    %1087 = vmatpush1.msra.mxu0 %v61
    %1088 = vmatprep.subr.mxu0 0.0
    %1089 = vmatpush1.msra.mxu0 %v62
    %1090 = vmatprep.subr.mxu0 0.0
    %1091 = vmatpush1.msra.mxu0 %v63
    %1092 = vmatprep.subr.mxu0 0.0
    %1093 = vmatpush1.msra.mxu0 %v64
    %1094 = vmatprep.subr.mxu0 0.0
    %1095 = vmatpush1.msra.mxu0 %v65
    %1096 = vmatprep.subr.mxu0 0.0
    %1097 = vmatpush1.msra.mxu0 %v66
    %1098 = vmatprep.subr.mxu0 0.0
    %1099 = vmatpush1.msra.mxu0 0.0
    %1100 = vmatprep.subr.mxu0 0.0
    %1101 = vmatpush1.msra.mxu0 0.0
    %1102 = vmatprep.subr.mxu0 0.0
    %1103 = vmatpush1.msra.mxu0 0.0
    %1104 = vmatprep.subr.mxu0 0.0
    %1105 = vmatpush1.msra.mxu0 0.0
    %1106 = vmatprep.subr.mxu0 0.0
    %1107 = vmatpush1.msra.mxu0 0.0
    %1108 = vmatprep.subr.mxu0 0.0
    %1109 = vmatpush1.msra.mxu0 0.0
    %1110 = vmatprep.subr.mxu0 0.0
    %1111 = vmatpush1.msra.mxu0 0.0
    %1112 = vmatprep.subr.mxu0 0.0
    %1113 = vmatpush1.msra.mxu0 0.0
    %1114 = vmatprep.subr.mxu0 0.0
    %1115 = vmatpush1.msra.mxu0 0.0
    %1116 = vmatprep.subr.mxu0 0.0
    %1117 = vmatpush1.msra.mxu0 0.0
    %1118 = vmatprep.subr.mxu0 0.0
    %1119 = vmatpush1.msra.mxu0 0.0
    %1120 = vmatprep.subr.mxu0 0.0
    %1121 = vmatpush1.msra.mxu0 0.0
    %1122 = vmatprep.subr.mxu0 0.0
    %1123 = vmatpush1.msra.mxu0 0.0
    %1124 = vmatprep.subr.mxu0 0.0
    %1125 = vmatpush1.msra.mxu0 0.0
    %1126 = vmatprep.subr.mxu0 0.0
    %1127 = vmatpush1.msra.mxu0 0.0
    %1128 = vmatprep.subr.mxu0 0.0
    %1129 = vmatpush1.msra.mxu0 0.0
    %1130 = vmatprep.subr.mxu0 0.0
    %1131 = vmatpush1.msra.mxu0 0.0
    %1132 = vmatprep.subr.mxu0 0.0
    %1133 = vmatpush1.msra.mxu0 0.0
    %1134 = vmatprep.subr.mxu0 0.0
    %1135 = vmatpush1.msra.mxu0 0.0
    %1136 = vmatprep.subr.mxu0 0.0
    %1137 = vmatpush1.msra.mxu0 0.0
    %1138 = vmatprep.subr.mxu0 0.0
    %1139 = vmatpush1.msra.mxu0 0.0
    %1140 = vmatprep.subr.mxu0 0.0
    %1141 = vmatpush1.msra.mxu0 0.0
    %1142 = vmatprep.subr.mxu0 0.0
    %1143 = vmatpush1.msra.mxu0 0.0
    %1144 = vmatprep.subr.mxu0 0.0
    %1145 = vmatpush1.msra.mxu0 0.0
    %1146 = vmatprep.mubr.f32.mxu0 0.0
    %1147 = vmatmul.mubr.f32.gmra.mrb[0].mxu0 %v1077
    %v1148 = vpop.f32.mrb[0].mxu0
    %v1149 = vadd.f32 %v1075, %v1148
    %v1150 = vpop.f32.mrb[0].mxu0
    %1151 = vmatprep.mubr.f32.mxu0 0.0
    %1152 = vmatmul.mubr.f32.gmra.mrb[0].mxu0 %v1080
    %v1153 = vpop.f32.mrb[0].mxu0
    %v1154 = vadd.f32 %v1075, %v1153
    %v1155 = vpop.f32.mrb[0].mxu0
    %1156 = vdwg.mxu0
    %v1157 = vadd.f32 %v1149, %v983
    %v1158 = vadd.f32 %v1154, %v984
    %1159 = vst.msk [vmem:[#allocation7] sm:$0xff] %vm244, %v1157
    %1160 = vst.msk [vmem:[#allocation7 + $0x8] sm:$0xff] %vm244, %v1158
    %1161 = vmatprep.subr.mxu0 0.0
    %1162 = vmatpush1.msra.mxu0 %v102
    %1163 = vmatprep.subr.mxu0 0.0
    %1164 = vmatpush1.msra.mxu0 %v103
    %1165 = vmatprep.subr.mxu0 0.0
    %1166 = vmatpush1.msra.mxu0 %v104
    %1167 = vmatprep.subr.mxu0 0.0
    %1168 = vmatpush1.msra.mxu0 %v105
    %1169 = vmatprep.subr.mxu0 0.0
    %1170 = vmatpush1.msra.mxu0 %v106
    %1171 = vmatprep.subr.mxu0 0.0
    %1172 = vmatpush1.msra.mxu0 %v107
    %1173 = vmatprep.subr.mxu0 0.0
    %1174 = vmatpush1.msra.mxu0 %v108
    %1175 = vmatprep.subr.mxu0 0.0
    %1176 = vmatpush1.msra.mxu0 %v109
    %1177 = vmatprep.subr.mxu0 0.0
    %1178 = vmatpush1.msra.mxu0 0.0
    %1179 = vmatprep.subr.mxu0 0.0
    %1180 = vmatpush1.msra.mxu0 0.0
    %1181 = vmatprep.subr.mxu0 0.0
    %1182 = vmatpush1.msra.mxu0 0.0
    %1183 = vmatprep.subr.mxu0 0.0
    %1184 = vmatpush1.msra.mxu0 0.0
    %1185 = vmatprep.subr.mxu0 0.0
    %1186 = vmatpush1.msra.mxu0 0.0
    %1187 = vmatprep.subr.mxu0 0.0
    %1188 = vmatpush1.msra.mxu0 0.0
    %1189 = vmatprep.subr.mxu0 0.0
    %1190 = vmatpush1.msra.mxu0 0.0
    %1191 = vmatprep.subr.mxu0 0.0
    %1192 = vmatpush1.msra.mxu0 0.0
    %1193 = vmatprep.subr.mxu0 0.0
    %1194 = vmatpush1.msra.mxu0 0.0
    %1195 = vmatprep.subr.mxu0 0.0
    %1196 = vmatpush1.msra.mxu0 0.0
    %1197 = vmatprep.subr.mxu0 0.0
    %1198 = vmatpush1.msra.mxu0 0.0
    %1199 = vmatprep.subr.mxu0 0.0
    %1200 = vmatpush1.msra.mxu0 0.0
    %1201 = vmatprep.subr.mxu0 0.0
    %1202 = vmatpush1.msra.mxu0 0.0
    %1203 = vmatprep.subr.mxu0 0.0
    %1204 = vmatpush1.msra.mxu0 0.0
    %1205 = vmatprep.subr.mxu0 0.0
    %1206 = vmatpush1.msra.mxu0 0.0
    %1207 = vmatprep.subr.mxu0 0.0
    %1208 = vmatpush1.msra.mxu0 0.0
    %1209 = vmatprep.subr.mxu0 0.0
    %1210 = vmatpush1.msra.mxu0 0.0
    %1211 = vmatprep.subr.mxu0 0.0
    %1212 = vmatpush1.msra.mxu0 0.0
    %1213 = vmatprep.subr.mxu0 0.0
    %1214 = vmatpush1.msra.mxu0 0.0
    %1215 = vmatprep.subr.mxu0 0.0
    %1216 = vmatpush1.msra.mxu0 0.0
    %1217 = vmatprep.subr.mxu0 0.0
    %1218 = vmatpush1.msra.mxu0 0.0
    %1219 = vmatprep.subr.mxu0 0.0
    %1220 = vmatpush1.msra.mxu0 0.0
    %1221 = vmatprep.subr.mxu0 0.0
    %1222 = vmatpush1.msra.mxu0 0.0
    %1223 = vmatprep.subr.mxu0 0.0
    %1224 = vmatpush1.msra.mxu0 0.0
    %1225 = vmatprep.mubr.f32.mxu0 0.0
    %1226 = vmatmul.mubr.f32.gmra.mrb[0].mxu0 %v689
    %v1227 = vpop.f32.mrb[0].mxu0
    %v1228 = vadd.f32 0.0, %v1227
    %v1229 = vpop.f32.mrb[0].mxu0
    %1230 = vmatprep.mubr.f32.mxu0 0.0
    %1231 = vmatmul.mubr.f32.gmra.mrb[0].mxu0 %v692
    %v1232 = vpop.f32.mrb[0].mxu0
    %v1233 = vadd.f32 0.0, %v1232
    %v1234 = vpop.f32.mrb[0].mxu0
    %1235 = vmatprep.mubr.f32.mxu0 0.0
    %1236 = vmatmul.mubr.f32.gmra.mrb[0].mxu0 %v695
    %v1237 = vpop.f32.mrb[0].mxu0
    %v1238 = vadd.f32 0.0, %v1237
    %v1239 = vpop.f32.mrb[0].mxu0
    %1240 = vmatprep.mubr.f32.mxu0 0.0
    %1241 = vmatmul.mubr.f32.gmra.mrb[0].mxu0 %v698
    %v1242 = vpop.f32.mrb[0].mxu0
    %v1243 = vadd.f32 0.0, %v1242
    %v1244 = vpop.f32.mrb[0].mxu0
    %1245 = vmatprep.mubr.f32.mxu0 0.0
    %1246 = vmatmul.mubr.f32.gmra.mrb[0].mxu0 %v701
    %v1247 = vpop.f32.mrb[0].mxu0
    %v1248 = vadd.f32 0.0, %v1247
    %v1249 = vpop.f32.mrb[0].mxu0
    %1250 = vmatprep.mubr.f32.mxu0 0.0
    %1251 = vmatmul.mubr.f32.gmra.mrb[0].mxu0 %v704
    %v1252 = vpop.f32.mrb[0].mxu0
    %v1253 = vadd.f32 0.0, %v1252
    %v1254 = vpop.f32.mrb[0].mxu0
    %1255 = vmatprep.mubr.f32.mxu0 0.0
    %1256 = vmatmul.mubr.f32.gmra.mrb[0].mxu0 %v707
    %v1257 = vpop.f32.mrb[0].mxu0
    %v1258 = vadd.f32 0.0, %v1257
    %v1259 = vpop.f32.mrb[0].mxu0
    %1260 = vmatprep.mubr.f32.mxu0 0.0
    %1261 = vmatmul.mubr.f32.gmra.mrb[0].mxu0 %v710
    %v1262 = vpop.f32.mrb[0].mxu0
    %v1263 = vadd.f32 0.0, %v1262
    %v1264 = vpop.f32.mrb[0].mxu0
    %1265 = vdwg.mxu0
    %vm1266 = vcmask 64512
    %1267 = vst.msk [vmem:[%s3] sm:$0xff] %vm1266, %v1228
    %1268 = vst.msk [vmem:[%s3 + $0x8] sm:$0xff] %vm1266, %v1233
    %1269 = vst.msk [vmem:[%s3 + $0x10] sm:$0xff] %vm1266, %v1238
    %1270 = vst.msk [vmem:[%s3 + $0x18] sm:$0xff] %vm1266, %v1243
    %1271 = vst.msk [vmem:[%s3 + $0x20] sm:$0xff] %vm1266, %v1248
    %1272 = vst.msk [vmem:[%s3 + $0x28] sm:$0xff] %vm1266, %v1253
    %1273 = vst.msk [vmem:[%s3 + $0x30] sm:$0xff] %vm1266, %v1258
    %1274 = vst.msk [vmem:[%s3 + $0x38] sm:$0xff] %vm1266, %v1263
    // Predicated region
    $region18: #{tpu_custom_call.1} parent=1 // pred_check
      _
    $region19: #{tpu_custom_call.1} parent=1 // pred_check_branch
      %1276 = sbr.rel (0) target = $region21
    $region20: #{tpu_custom_call.1} parent=1 // pred_region
      %s1278 = ssub.s32 256, 256
      %1279 = vsyncadd [#allocation4], %s1278
      %s1280 = sshll.u32 [#allocation7], 4
      %s1281 = int_to_ptr.vmem [resolvable:$true] %s1280
      %1286 = dma.vmem_to_hbm [thread:$0]  %s1281, 256, %s2, [#allocation4], 128, 128, 8
    $region21: #{tpu_custom_call.1} parent=1 // pred_fallthru
      _
    // Predicated region
    $region22: #{tpu_custom_call.1} parent=1 // pred_check
      _
    $region23: #{tpu_custom_call.1} parent=1 // pred_check_branch
      %1288 = sbr.rel (0) target = $region25
    $region24: #{tpu_custom_call.1} parent=1 // pred_region
      _
    $region25: #{tpu_custom_call.1} parent=1 // pred_fallthru
      _
    // Predicated region
    $region26: #{tpu_custom_call.1} parent=1 // pred_check
      _
    $region27: #{tpu_custom_call.1} parent=1 // pred_check_branch
      %1290 = sbr.rel (0) target = $region29
    $region28: #{tpu_custom_call.1} parent=1 // pred_region
      %1291 = dma.done [#allocation4], 256
    $region29: #{tpu_custom_call.1} parent=1 // pred_fallthru
      _
    // Predicated region
    $region30: #{tpu_custom_call.1} parent=1 // pred_check
      _
    $region31: #{tpu_custom_call.1} parent=1 // pred_check_branch
      %1293 = sbr.rel (0) target = $region33
    $region32: #{tpu_custom_call.1} parent=1 // pred_region
      _
    $region33: #{tpu_custom_call.1} parent=1 // pred_fallthru
      _
    %1294 = vsyncpa [#allocation3], 1
    %1295 = vsyncpa [#allocation6], 1
    %1296 = vsyncpa [#allocation4], 1

</llo_original>
